<compile_context>
chip_gen: v7x
topology: tpu7x:2x2x1
jax: 0.10.0
libtpu: 0.0.40
codegen_flags: <defaults>
</compile_context>

<pallas_src>
import jax
import jax.numpy as jnp
import numpy as np
from jax import lax
from jax.experimental import pallas as pl
from jax.experimental.pallas import tpu as pltpu

K_CURV = 1.0     # Lorentz curvature parameter k
LN_EPS = 1e-5    # nn.LayerNorm default eps


def _round_up(a, b):
    return ((a + b - 1) // b) * b


def hypnorm_kernel(x_ref, gamma_ref, beta_ref, o_ref):
    """One (tn, d) row-block: logmap0 -> LayerNorm(spatial dims) -> expmap0."""
    d = x_ref.shape[1]
    inv_nf = jnp.float32(1.0 / (d - 1))
    sqrt_k = jnp.float32(np.sqrt(K_CURV))
    inv_sqrt_k = jnp.float32(1.0 / np.sqrt(K_CURV))

    # Contiguous (tn, d) block from HBM; relayout to lane-dense (d, tn) on the
    # (otherwise idle) XLU so feature reductions become sublane reductions and
    # all per-row scalars live in lane-dense (1, tn) vectors.
    x = x_ref[...].astype(jnp.float32).T                      # (d, tn)

    # ---- Lorentz logmap0 scale: arccosh(alpha) / sqrt(alpha^2 - 1) ----------
    # NOTE: this formulation (shared with the reference / original module)
    # loses precision in f32 as alpha -> 1 (points very near the origin).
    x0 = x[0:1, :]                                            # time row
    alpha = x0 * inv_sqrt_k
    am1 = jnp.maximum(alpha * alpha - 1.0, 1e-15)
    inv_den = lax.rsqrt(am1)                                  # EUP
    scale = jnp.log(alpha + am1 * inv_den) * inv_den          # (1, tn)

    # ---- LayerNorm statistics over the d-1 spatial rows ---------------------
    # One-pass moments with the logmap scale folded in: u = scale * x is never
    # materialized, keeping only x (and later v) live across the reductions.
    sum_x = jnp.sum(x, axis=0, keepdims=True) - x0
    sum_x2 = jnp.sum(x * x, axis=0, keepdims=True) - x0 * x0
    mean = scale * sum_x * inv_nf                             # (1, tn)
    ex2 = (scale * scale) * sum_x2 * inv_nf
    var = jnp.maximum(ex2 - mean * mean, 0.0)
    inv = lax.rsqrt(var + jnp.float32(LN_EPS))                # EUP
    a = scale * inv                                           # (1, tn)
    b = -mean * inv                                           # (1, tn)

    # v = LayerNorm(logmap0(x)[1:]) scaled/shifted by gamma/beta.
    # Wrapper invariant gamma_p[0] = beta_p[0] = 0 makes v's time row exactly 0
    # -- no masks or selects needed for the spatial part.
    v = (a * x + b) * gamma_ref[...] + beta_ref[...]          # (d, tn)

    # ---- Lorentz expmap0 -----------------------------------------------------
    r2 = jnp.maximum(jnp.sum(v * v, axis=0, keepdims=True), 1e-8)  # row 0 adds 0
    inv_r = lax.rsqrt(r2)                                     # EUP, no divide
    r = r2 * inv_r                                            # = sqrt(r2)
    arg = r * inv_sqrt_k
    e_pos = jnp.exp(arg)                                      # EUP
    e_neg = jnp.exp(-arg)                                     # EUP (instead of 1/e)
    cosh_r = 0.5 * (e_pos + e_neg)
    sinh_r = 0.5 * (e_pos - e_neg)
    factor = sqrt_k * sinh_r * inv_r                          # (1, tn)

    # Time row = sqrt(k) * cosh(r / sqrt(k)); spatial rows = factor * v.
    row0 = lax.broadcasted_iota(jnp.int32, (d, 1), 0) == 0    # tiny (d, 1) mask
    out = jnp.where(row0, sqrt_k * cosh_r, factor * v)        # (d, tn)

    # Relayout back and store the block in its natural (tn, d) HBM layout.
    o_ref[...] = out.T.astype(o_ref.dtype)


def hypnorm(x, gamma, beta, *, tn=4096):
    """Lorentz HypNorm forward.  x: (..., d); gamma/beta: (d-1,) LayerNorm params."""
    d = x.shape[-1]
    assert d >= 2, "Lorentz points need a time coordinate plus >= 1 spatial dim"
    assert gamma.shape == (d - 1,) and beta.shape == (d - 1,)
    x2 = x.reshape(-1, d)                  # collapse leading dims (layout-free)
    n = x2.shape[0]

    # Big contiguous row-tiles for DMA efficiency, capped so the 1-D grid keeps
    # >= 2 steps (lets the "parallel" axis shard across v7x's two TensorCores).
    # No host-side padding: Pallas handles the ragged last tile.
    tn = max(8, min(tn, max(8, _round_up((n + 1) // 2, 8))))
    grid = pl.cdiv(n, tn)

    # LayerNorm params stay in f32 (no silent downcast for bf16 activations)
    # and get a leading zero slot for the time coordinate.
    # Invariant: gamma_p[0] == beta_p[0] == 0  =>  v's time row is exactly 0.
    zero = jnp.zeros((1,), jnp.float32)
    gamma_p = jnp.concatenate([zero, gamma.astype(jnp.float32)]).reshape(d, 1)
    beta_p = jnp.concatenate([zero, beta.astype(jnp.float32)]).reshape(d, 1)

    out = pl.pallas_call(
        hypnorm_kernel,
        out_shape=jax.ShapeDtypeStruct((n, d), x.dtype),
        grid_spec=pltpu.PrefetchScalarGridSpec(
            num_scalar_prefetch=0,
            grid=(grid,),
            in_specs=[
                pl.BlockSpec((tn, d), lambda i: (i, 0)),
                pl.BlockSpec((d, 1), lambda i: (0, 0)),
                pl.BlockSpec((d, 1), lambda i: (0, 0)),
            ],
            out_specs=pl.BlockSpec((tn, d), lambda i: (i, 0)),
        ),
        compiler_params=pltpu.CompilerParams(
            dimension_semantics=("parallel",),
            vmem_limit_bytes=32 * 1024 * 1024,
        ),
    )(x2, gamma_p, beta_p)
    return out.reshape(x.shape)


def ref_hypnorm(x, gamma, beta):
    """Pure-JAX reference of the same math, for validation."""
    sk = jnp.sqrt(jnp.float32(K_CURV))
    x0, xs = x[..., :1], x[..., 1:]
    alpha = x0 / sk
    denom = jnp.sqrt(jnp.maximum(alpha * alpha - 1.0, 1e-15))
    u = jnp.log(alpha + denom) / denom * xs
    mean = u.mean(-1, keepdims=True)
    var = ((u - mean) ** 2).mean(-1, keepdims=True)
    v = (u - mean) / jnp.sqrt(var + LN_EPS) * gamma + beta
    r = jnp.sqrt(jnp.maximum(jnp.sum(v * v, -1, keepdims=True), 1e-8))
    time = sk * jnp.cosh(r / sk)
    space = sk * jnp.sinh(r / sk) * v / r
    return jnp.concatenate([time, space], axis=-1)


if __name__ == "__main__":
    IN_FEATURES = 33                      # LayerNorm acts on in_features - 1 = 32 dims
    key = jax.random.PRNGKey(0)
    kx, kg, kb, kx2 = jax.random.split(key, 4)

    def lorentz_points(k, n):
        # Valid Lorentz points: random spatial part, time = sqrt(k + ||xs||^2).
        xs = 0.5 * jax.random.normal(k, (n, IN_FEATURES - 1), dtype=jnp.float32)
        x0 = jnp.sqrt(K_CURV + jnp.sum(xs * xs, axis=-1, keepdims=True))
        return jnp.concatenate([x0, xs], axis=-1)

    x = lorentz_points(kx, 256)

    # Check 1: nn.LayerNorm default init (weight=1, bias=0) — matches the module.
    gamma = jnp.ones((IN_FEATURES - 1,), jnp.float32)
    beta = jnp.zeros((IN_FEATURES - 1,), jnp.float32)
    out = hypnorm(x, gamma, beta)
    jax.block_until_ready(out)
    np.testing.assert_allclose(np.asarray(out), np.asarray(ref_hypnorm(x, gamma, beta)),
                               rtol=1e-4, atol=1e-4)

    # Check 2: non-trivial (learned) LayerNorm params exercise the gamma/beta path.
    gamma2 = 1.0 + 0.1 * jax.random.normal(kg, (IN_FEATURES - 1,), jnp.float32)
    beta2 = 0.1 * jax.random.normal(kb, (IN_FEATURES - 1,), jnp.float32)
    out2 = hypnorm(x, gamma2, beta2)
    jax.block_until_ready(out2)
    np.testing.assert_allclose(np.asarray(out2), np.asarray(ref_hypnorm(x, gamma2, beta2)),
                               rtol=1e-4, atol=1e-4)

    # Check 3: N not a multiple of the tile -> ragged last block, no host padding.
    x3 = lorentz_points(kx2, 200)
    out3 = hypnorm(x3, gamma2, beta2)
    jax.block_until_ready(out3)
    np.testing.assert_allclose(np.asarray(out3), np.asarray(ref_hypnorm(x3, gamma2, beta2)),
                               rtol=1e-4, atol=1e-4)

    print("KERNEL_OK")
</pallas_src>

<mosaic_0001>
module attributes {stable_mosaic.version = 11 : i64} {
  func.func @hypnorm_kernel(%arg0: i32, %arg1: memref<128x33xf32, #tpu.memory_space<vmem>>, %arg2: memref<33x1xf32, #tpu.memory_space<vmem>>, %arg3: memref<33x1xf32, #tpu.memory_space<vmem>>, %arg4: memref<128x33xf32, #tpu.memory_space<vmem>>) attributes {dimension_semantics = [#tpu.dimension_semantics<parallel>], iteration_bounds = array<i64: 2>, scalar_prefetch = 0 : i64, scratch_operands = 0 : i64, tpu.core_type = #tpu.core_type<tc>, window_params = [{transform_indices = @transform_0, window_bounds = array<i64: 128, 33>}, {pipeline_mode = #tpu.pipeline_mode<synchronous>, transform_indices = @transform_1, window_bounds = array<i64: 33, 1>}, {pipeline_mode = #tpu.pipeline_mode<synchronous>, transform_indices = @transform_2, window_bounds = array<i64: 33, 1>}, {transform_indices = @transform_3, window_bounds = array<i64: 128, 33>}]} {
    %c0 = arith.constant 0 : index
    %c0_0 = arith.constant 0 : index
    %0 = vector.load %arg1[%c0, %c0_0] : memref<128x33xf32, #tpu.memory_space<vmem>>, vector<128x33xf32>
    %1 = tpu.transpose %0, [1, 0] : vector<128x33xf32> -> vector<33x128xf32>
    %2 = vector.extract_strided_slice %1 {offsets = [0, 0], sizes = [1, 128], strides = [1, 1]} : vector<33x128xf32> to vector<1x128xf32>
    %cst = arith.constant 1.000000e+00 : f32
    %3 = vector.broadcast %cst : f32 to vector<1x128xf32>
    %4 = arith.mulf %2, %3 : vector<1x128xf32>
    %5 = arith.mulf %4, %4 : vector<1x128xf32>
    %cst_1 = arith.constant 1.000000e+00 : f32
    %6 = vector.broadcast %cst_1 : f32 to vector<1x128xf32>
    %7 = arith.subf %5, %6 : vector<1x128xf32>
    %cst_2 = arith.constant 1.000000e-15 : f32
    %8 = vector.broadcast %cst_2 : f32 to vector<1x128xf32>
    %9 = arith.maximumf %7, %8 : vector<1x128xf32>
    %10 = math.rsqrt %9 : vector<1x128xf32>
    %11 = arith.mulf %9, %10 : vector<1x128xf32>
    %12 = arith.addf %4, %11 : vector<1x128xf32>
    %13 = math.log %12 : vector<1x128xf32>
    %14 = arith.mulf %13, %10 : vector<1x128xf32>
    %cst_3 = arith.constant dense<0.000000e+00> : vector<128xf32>
    %15 = vector.multi_reduction <add>, %1, %cst_3 [0] : vector<33x128xf32> to vector<128xf32>
    %16 = vector.shape_cast %15 : vector<128xf32> to vector<1x128xf32>
    %17 = arith.subf %16, %2 : vector<1x128xf32>
    %18 = arith.mulf %1, %1 : vector<33x128xf32>
    %cst_4 = arith.constant dense<0.000000e+00> : vector<128xf32>
    %19 = vector.multi_reduction <add>, %18, %cst_4 [0] : vector<33x128xf32> to vector<128xf32>
    %20 = vector.shape_cast %19 : vector<128xf32> to vector<1x128xf32>
    %21 = arith.mulf %2, %2 : vector<1x128xf32>
    %22 = arith.subf %20, %21 : vector<1x128xf32>
    %23 = arith.mulf %14, %17 : vector<1x128xf32>
    %cst_5 = arith.constant 3.125000e-02 : f32
    %24 = vector.broadcast %cst_5 : f32 to vector<1x128xf32>
    %25 = arith.mulf %23, %24 : vector<1x128xf32>
    %26 = arith.mulf %14, %14 : vector<1x128xf32>
    %27 = arith.mulf %26, %22 : vector<1x128xf32>
    %cst_6 = arith.constant 3.125000e-02 : f32
    %28 = vector.broadcast %cst_6 : f32 to vector<1x128xf32>
    %29 = arith.mulf %27, %28 : vector<1x128xf32>
    %30 = arith.mulf %25, %25 : vector<1x128xf32>
    %31 = arith.subf %29, %30 : vector<1x128xf32>
    %cst_7 = arith.constant 0.000000e+00 : f32
    %32 = vector.broadcast %cst_7 : f32 to vector<1x128xf32>
    %33 = arith.maximumf %31, %32 : vector<1x128xf32>
    %cst_8 = arith.constant 9.99999974E-6 : f32
    %34 = vector.broadcast %cst_8 : f32 to vector<1x128xf32>
    %35 = arith.addf %33, %34 : vector<1x128xf32>
    %36 = math.rsqrt %35 : vector<1x128xf32>
    %37 = arith.mulf %14, %36 : vector<1x128xf32>
    %cst_9 = arith.constant 0.000000e+00 : f32
    %38 = vector.broadcast %cst_9 : f32 to vector<1x128xf32>
    %39 = arith.subf %38, %25 : vector<1x128xf32>
    %40 = arith.mulf %39, %36 : vector<1x128xf32>
    %41 = vector.broadcast %37 : vector<1x128xf32> to vector<33x128xf32>
    %42 = arith.mulf %41, %1 : vector<33x128xf32>
    %43 = vector.broadcast %40 : vector<1x128xf32> to vector<33x128xf32>
    %44 = arith.addf %42, %43 : vector<33x128xf32>
    %c0_10 = arith.constant 0 : index
    %c0_11 = arith.constant 0 : index
    %45 = vector.load %arg2[%c0_10, %c0_11] : memref<33x1xf32, #tpu.memory_space<vmem>>, vector<33x1xf32>
    %46 = vector.broadcast %45 : vector<33x1xf32> to vector<33x128xf32>
    %47 = arith.mulf %44, %46 : vector<33x128xf32>
    %c0_12 = arith.constant 0 : index
    %c0_13 = arith.constant 0 : index
    %48 = vector.load %arg3[%c0_12, %c0_13] : memref<33x1xf32, #tpu.memory_space<vmem>>, vector<33x1xf32>
    %49 = vector.broadcast %48 : vector<33x1xf32> to vector<33x128xf32>
    %50 = arith.addf %47, %49 : vector<33x128xf32>
    %51 = arith.mulf %50, %50 : vector<33x128xf32>
    %cst_14 = arith.constant dense<0.000000e+00> : vector<128xf32>
    %52 = vector.multi_reduction <add>, %51, %cst_14 [0] : vector<33x128xf32> to vector<128xf32>
    %53 = vector.shape_cast %52 : vector<128xf32> to vector<1x128xf32>
    %cst_15 = arith.constant 9.99999993E-9 : f32
    %54 = vector.broadcast %cst_15 : f32 to vector<1x128xf32>
    %55 = arith.maximumf %53, %54 : vector<1x128xf32>
    %56 = math.rsqrt %55 : vector<1x128xf32>
    %57 = arith.mulf %55, %56 : vector<1x128xf32>
    %cst_16 = arith.constant 1.000000e+00 : f32
    %58 = vector.broadcast %cst_16 : f32 to vector<1x128xf32>
    %59 = arith.mulf %57, %58 : vector<1x128xf32>
    %60 = math.exp %59 : vector<1x128xf32>
    %cst_17 = arith.constant 0.000000e+00 : f32
    %61 = vector.broadcast %cst_17 : f32 to vector<1x128xf32>
    %62 = arith.subf %61, %59 : vector<1x128xf32>
    %63 = math.exp %62 : vector<1x128xf32>
    %64 = arith.addf %60, %63 : vector<1x128xf32>
    %cst_18 = arith.constant 5.000000e-01 : f32
    %65 = vector.broadcast %cst_18 : f32 to vector<1x128xf32>
    %66 = arith.mulf %65, %64 : vector<1x128xf32>
    %67 = arith.subf %60, %63 : vector<1x128xf32>
    %cst_19 = arith.constant 5.000000e-01 : f32
    %68 = vector.broadcast %cst_19 : f32 to vector<1x128xf32>
    %69 = arith.mulf %68, %67 : vector<1x128xf32>
    %cst_20 = arith.constant 1.000000e+00 : f32
    %70 = vector.broadcast %cst_20 : f32 to vector<1x128xf32>
    %71 = arith.mulf %70, %69 : vector<1x128xf32>
    %72 = arith.mulf %71, %56 : vector<1x128xf32>
    %73 = tpu.iota {dimensions = array<i32: 0>} : vector<33x1xi32>
    %c0_i32 = arith.constant 0 : i32
    %74 = vector.broadcast %c0_i32 : i32 to vector<33x1xi32>
    %75 = arith.cmpi eq, %73, %74 : vector<33x1xi32>
    %cst_21 = arith.constant 1.000000e+00 : f32
    %76 = vector.broadcast %cst_21 : f32 to vector<1x128xf32>
    %77 = arith.mulf %76, %66 : vector<1x128xf32>
    %78 = vector.broadcast %72 : vector<1x128xf32> to vector<33x128xf32>
    %79 = arith.mulf %78, %50 : vector<33x128xf32>
    %80 = vector.shape_cast %75 : vector<33x1xi1> to vector<33x1xi1>
    %81 = vector.broadcast %80 : vector<33x1xi1> to vector<33x128xi1>
    %82 = vector.shape_cast %77 : vector<1x128xf32> to vector<1x128xf32>
    %83 = vector.broadcast %82 : vector<1x128xf32> to vector<33x128xf32>
    %84 = arith.select %81, %83, %79 : vector<33x128xi1>, vector<33x128xf32>
    %85 = tpu.transpose %84, [1, 0] : vector<33x128xf32> -> vector<128x33xf32>
    %c0_22 = arith.constant 0 : index
    %c0_23 = arith.constant 0 : index
    %86 = vector.load %arg4[%c0_22, %c0_23] : memref<128x33xf32, #tpu.memory_space<vmem>>, vector<128x33xf32>
    tpu.vector_store %arg4[%c0_22, %c0_23], %85 {strides = array<i32>} : memref<128x33xf32, #tpu.memory_space<vmem>>, vector<128x33xf32>,
    return
  }
  func.func @transform_0(%arg0: i32) -> (i32, i32) {
    %c0_i32 = arith.constant 0 : i32
    %c0_i32_0 = arith.constant 0 : i32
    return %arg0, %c0_i32 : i32, i32
  }
  func.func @transform_1(%arg0: i32) -> (i32, i32) {
    %c0_i32 = arith.constant 0 : i32
    %c0_i32_0 = arith.constant 0 : i32
    %c0_i32_1 = arith.constant 0 : i32
    return %c0_i32, %c0_i32_0 : i32, i32
  }
  func.func @transform_2(%arg0: i32) -> (i32, i32) {
    %c0_i32 = arith.constant 0 : i32
    %c0_i32_0 = arith.constant 0 : i32
    %c0_i32_1 = arith.constant 0 : i32
    return %c0_i32, %c0_i32_0 : i32, i32
  }
  func.func @transform_3(%arg0: i32) -> (i32, i32) {
    %c0_i32 = arith.constant 0 : i32
    %c0_i32_0 = arith.constant 0 : i32
    return %arg0, %c0_i32 : i32, i32
  }
}

</mosaic_0001>

<llo_original>
// kernel: tpu_custom_call.1
$region0: #{tpu_custom_call.1}
  #allocation0 [shape = 'u32[]', space=smem, size = 0x4, offset = 0x4, fixed_abs, tag = 'smem constant byte address 0x4 - core index']
  #allocation1 [shape = 'u32[144,128]{1,0:T(1,128)}', space=vmem, size = 0x12000, scoped, tag = 'internal scratch']
  %s0 = inlined_call_operand.vmem [shape: f32[256,33], index: 0, kind: input, shape index: {}]
  %s1 = inlined_call_operand.vmem [shape: f32[33,1], index: 1, kind: input, shape index: {}]
  %s2 = inlined_call_operand.vmem [shape: f32[33,1], index: 2, kind: input, shape index: {}]
  %s3 = inlined_call_operand.vmem [shape: f32[256,33], index: 3, kind: output, shape index: {}]
  %s4 = sld [smem:[#allocation0]]
  $region45: #{tpu_custom_call.1} parent=0
    _
  %s6 = ssub.s32 1, %s4
  %s7 = scalar_select 0, %s6, %s4
  loop: start=0, step=1, limit=4
  $region2: #{tpu_custom_call.1} parent=0 // loop_pre_header
    _
  $region3: #{tpu_custom_call.1} parent=0 // loop_header
    %s9 = sphi 0, %s13
    %p10 = scmp.ge.s32.totalorder %s9, 4
    %s19 = sphi 0, %s21
    %s22 = sphi 0, %s19
    %s23 = sphi 0, %s22
    %s39 = sphi 0, %s23
    %s43 = sphi 0, %s43
    %s45 = sphi 0, %s43
    %s46 = sphi 0, %s45
    %s60 = sphi 0, %s46
    %s64 = sphi 0, %s64
    %s66 = sphi 0, %s64
    %s67 = sphi 0, %s66
    %s81 = sphi 0, %s67
    %s87 = sphi 0, %s89
    %s90 = sphi 0, %s87
    %s91 = sphi 0, %s90
    %s107 = sphi 0, %s91
  $region4: #{tpu_custom_call.1} parent=0 // loop_header_branch
    %12 = sbr.rel (%p10) target = $region8
  $region5: #{tpu_custom_call.1} parent=0 // loop_body
    %s14 = ssub.s32 %s9, 1
    %s15 = ssub.s32 %s9, 2
    %s16 = sadd.s32 %s9, 1
    %s17 = ssub.s32 %s9, %s16
    %p18 = scmp.eq.s32.totalorder %s17, 0
    %s20 = sadd.s32 %s19, 1
    %s21 = scalar_select %p18, %s19, %s20
    %p24 = pneg %p18
    %p25 = scmp.eq.s32.totalorder %s9, 1
    %p26 = por %p24, %p25
    %p27 = scmp.ne.s32.totalorder %s19, %s22
    %p28 = scmp.eq.s32.totalorder %s9, 0
    %p29 = por %p27, %p28
    %p30 = scmp.ne.s32.totalorder %s19, %s22
    %p31 = scmp.eq.s32.totalorder %s14, 1
    %p32 = por %p30, %p31
    %p33 = scmp.ne.s32.totalorder %s22, %s23
    %p34 = scmp.eq.s32.totalorder %s14, 0
    %p35 = por %p33, %p34
    %p36 = scmp.ne.s32.totalorder %s22, %s23
    %p37 = scmp.eq.s32.totalorder %s15, 1
    %p38 = por %p36, %p37
    %p40 = scmp.ne.s32.totalorder %s23, %s39
    %p41 = scmp.eq.s32.totalorder %s15, 0
    %p42 = por %p40, %p41
    %s44 = sadd.s32 %s43, 1
    %p47 = scmp.eq.s32.totalorder %s9, 1
    %p48 = scmp.ne.s32.totalorder %s43, %s45
    %p49 = scmp.eq.s32.totalorder %s9, 0
    %p50 = por %p48, %p49
    %p51 = scmp.ne.s32.totalorder %s43, %s45
    %p52 = scmp.eq.s32.totalorder %s14, 1
    %p53 = por %p51, %p52
    %p54 = scmp.ne.s32.totalorder %s45, %s46
    %p55 = scmp.eq.s32.totalorder %s14, 0
    %p56 = por %p54, %p55
    %p57 = scmp.ne.s32.totalorder %s45, %s46
    %p58 = scmp.eq.s32.totalorder %s15, 1
    %p59 = por %p57, %p58
    %p61 = scmp.ne.s32.totalorder %s46, %s60
    %p62 = scmp.eq.s32.totalorder %s15, 0
    %p63 = por %p61, %p62
    %s65 = sadd.s32 %s64, 1
    %p68 = scmp.eq.s32.totalorder %s9, 1
    %p69 = scmp.ne.s32.totalorder %s64, %s66
    %p70 = scmp.eq.s32.totalorder %s9, 0
    %p71 = por %p69, %p70
    %p72 = scmp.ne.s32.totalorder %s64, %s66
    %p73 = scmp.eq.s32.totalorder %s14, 1
    %p74 = por %p72, %p73
    %p75 = scmp.ne.s32.totalorder %s66, %s67
    %p76 = scmp.eq.s32.totalorder %s14, 0
    %p77 = por %p75, %p76
    %p78 = scmp.ne.s32.totalorder %s66, %s67
    %p79 = scmp.eq.s32.totalorder %s15, 1
    %p80 = por %p78, %p79
    %p82 = scmp.ne.s32.totalorder %s67, %s81
    %p83 = scmp.eq.s32.totalorder %s15, 0
    %p84 = por %p82, %p83
    %s85 = ssub.s32 %s9, %s16
    %p86 = scmp.eq.s32.totalorder %s85, 0
    %s88 = sadd.s32 %s87, 1
    %s89 = scalar_select %p86, %s87, %s88
    %p92 = pneg %p86
    %p93 = scmp.eq.s32.totalorder %s9, 1
    %p94 = por %p92, %p93
    %p95 = scmp.ne.s32.totalorder %s87, %s90
    %p96 = scmp.eq.s32.totalorder %s9, 0
    %p97 = por %p95, %p96
    %p98 = scmp.ne.s32.totalorder %s87, %s90
    %p99 = scmp.eq.s32.totalorder %s14, 1
    %p100 = por %p98, %p99
    %p101 = scmp.ne.s32.totalorder %s90, %s91
    %p102 = scmp.eq.s32.totalorder %s14, 0
    %p103 = por %p101, %p102
    %p104 = scmp.ne.s32.totalorder %s90, %s91
    %p105 = scmp.eq.s32.totalorder %s15, 1
    %p106 = por %p104, %p105
    %p108 = scmp.ne.s32.totalorder %s91, %s107
    %p109 = scmp.eq.s32.totalorder %s15, 0
    %p110 = por %p108, %p109
    %p111 = scmp.le.s32.totalorder 1, %s9
    %p112 = scmp.lt.s32.totalorder %s9, 3
    %p113 = pnand %p111, %p112
    %p114 = pneg %p113
    // Predicated region
    $region9: #{tpu_custom_call.1} parent=5 // pred_check
      _
    $region10: #{tpu_custom_call.1} parent=5 // pred_check_branch
      %116 = sbr.rel (%p113) target = $region12
    $region11: #{tpu_custom_call.1} parent=5 // pred_region
      %s117 = ssub.s32 %s9, 1
      // Predicated region
      $region13: #{tpu_custom_call.1} parent=11 // pred_check
        %p118 = pneg %p56
      $region14: #{tpu_custom_call.1} parent=11 // pred_check_branch
        %120 = sbr.rel (%p118) target = $region16
      $region15: #{tpu_custom_call.1} parent=11 // pred_region
        _
      $region16: #{tpu_custom_call.1} parent=11 // pred_fallthru
        _
      // Predicated region
      $region17: #{tpu_custom_call.1} parent=11 // pred_check
        %p121 = pneg %p77
      $region18: #{tpu_custom_call.1} parent=11 // pred_check_branch
        %123 = sbr.rel (%p121) target = $region20
      $region19: #{tpu_custom_call.1} parent=11 // pred_region
        _
      $region20: #{tpu_custom_call.1} parent=11 // pred_fallthru
        _
    $region12: #{tpu_custom_call.1} parent=5 // pred_fallthru
      _
    %p124 = scmp.lt.s32.totalorder %s9, 2
    // Predicated region
    $region21: #{tpu_custom_call.1} parent=5 // pred_check
      %p125 = pneg %p124
    $region22: #{tpu_custom_call.1} parent=5 // pred_check_branch
      %127 = sbr.rel (%p125) target = $region24
    $region23: #{tpu_custom_call.1} parent=5 // pred_region
      // Predicated region
      $region25: #{tpu_custom_call.1} parent=23 // pred_check
        %p128 = pneg %p29
      $region26: #{tpu_custom_call.1} parent=23 // pred_check_branch
        %130 = sbr.rel (%p128) target = $region28
      $region27: #{tpu_custom_call.1} parent=23 // pred_region
        %s131 = smul.u32 16, %s9
        %p132 = scmp.lt.s32.totalorder %s131, 31
        %s133 = scalar_select %p132, %s131, 31
        %s134 = smul.addr %s133, 8
        %s135 = scalar_lea.vmem %s0, %s134
        %s136 = smul.u32 16, %s9
      $region28: #{tpu_custom_call.1} parent=23 // pred_fallthru
        _
    $region24: #{tpu_custom_call.1} parent=5 // pred_fallthru
      _
    %p137 = scmp.le.s32.totalorder 1, %s9
    %p138 = scmp.lt.s32.totalorder %s9, 3
    %p139 = pnand %p137, %p138
    %p140 = pneg %p139
    // Predicated region
    $region29: #{tpu_custom_call.1} parent=5 // pred_check
      _
    $region30: #{tpu_custom_call.1} parent=5 // pred_check_branch
      %142 = sbr.rel (%p139) target = $region32
    $region31: #{tpu_custom_call.1} parent=5 // pred_region
      %s143 = ssub.s32 %s9, 1
      %s144 = smul.u32 16, %s14
      %p145 = scmp.lt.s32.totalorder %s144, 31
      %s146 = scalar_select %p145, %s144, 31
      %s147 = smul.addr %s146, 8
      %s148 = scalar_lea.vmem %s0, %s147
      %p149 = pneg %p35
      %p150 = pneg %p32
      %p151 = pneg %p56
      %p152 = pneg %p53
      %p153 = pneg %p77
      %p154 = pneg %p74
      %p155 = pneg %p103
      %p156 = pneg %p100
      %s157 = smul.u32 16, %s14
      %p158 = scmp.lt.s32.totalorder %s157, 31
      %s159 = scalar_select %p158, %s157, 31
      %s160 = smul.addr %s159, 8
      %s161 = scalar_lea.vmem %s3, %s160
      %s162 = smul.u32 16, %s14
      %p163 = scmp.lt.s32.totalorder %s162, 31
      %s164 = scalar_select %p163, %s162, 31
      %s165 = smul.addr %s164, 8
      %s166 = scalar_lea.vmem %s0, %s165
      %s167 = smul.u32 16, %s14
      %s168 = smul.u32 16, %s14
      %p169 = scmp.lt.s32.totalorder %s168, 31
      %s170 = scalar_select %p169, %s168, 31
      %s171 = smul.addr %s170, 8
      %s172 = scalar_lea.vmem %s3, %s171
      %s173 = smul.u32 16, %s14
      %v174 = vld [vmem:[%s166] sm:$0xff]
      %v175 = vld [vmem:[%s166 + $0x8] sm:$0xff]
      %v176 = vld [vmem:[%s166 + $0x10] sm:$0xff]
      %v177 = vld [vmem:[%s166 + $0x18] sm:$0xff]
      %v178 = vld [vmem:[%s166 + $0x20] sm:$0xff]
      %v179 = vld [vmem:[%s166 + $0x28] sm:$0xff]
      %v180 = vld [vmem:[%s166 + $0x30] sm:$0xff]
      %v181 = vld [vmem:[%s166 + $0x38] sm:$0xff]
      %v182 = vld [vmem:[%s166 + $0x40] sm:$0xff]
      %v183 = vld [vmem:[%s166 + $0x48] sm:$0xff]
      %v184 = vld [vmem:[%s166 + $0x50] sm:$0xff]
      %v185 = vld [vmem:[%s166 + $0x58] sm:$0xff]
      %v186 = vld [vmem:[%s166 + $0x60] sm:$0xff]
      %v187 = vld [vmem:[%s166 + $0x68] sm:$0xff]
      %v188 = vld [vmem:[%s166 + $0x70] sm:$0xff]
      %v189 = vld [vmem:[%s166 + $0x78] sm:$0xff]
      %190 = vxpose.xlu0.b32.start [1/16] %v174, 128
      %191 = vxpose.xlu0.b32.cont [2/16] %v175, 128
      %192 = vxpose.xlu0.b32.cont [3/16] %v176, 128
      %193 = vxpose.xlu0.b32.cont [4/16] %v177, 128
      %194 = vxpose.xlu0.b32.cont [5/16] %v178, 128
      %195 = vxpose.xlu0.b32.cont [6/16] %v179, 128
      %196 = vxpose.xlu0.b32.cont [7/16] %v180, 128
      %197 = vxpose.xlu0.b32.cont [8/16] %v181, 128
      %198 = vxpose.xlu0.b32.cont [9/16] %v182, 128
      %199 = vxpose.xlu0.b32.cont [10/16] %v183, 128
      %200 = vxpose.xlu0.b32.cont [11/16] %v184, 128
      %201 = vxpose.xlu0.b32.cont [12/16] %v185, 128
      %202 = vxpose.xlu0.b32.cont [13/16] %v186, 128
      %203 = vxpose.xlu0.b32.cont [14/16] %v187, 128
      %204 = vxpose.xlu0.b32.cont [15/16] %v188, 128
      %205 = vxpose.xlu0.b32.end [16/16] %v189, 128
      %v206 = vpop.trf.xlu0
      %v207 = vpop.trf.xlu0
      %v208 = vpop.trf.xlu0
      %v209 = vpop.trf.xlu0
      %v210 = vpop.trf.xlu0
      %v211 = vpop.trf.xlu0
      %v212 = vpop.trf.xlu0
      %v213 = vpop.trf.xlu0
      %v214 = vpop.trf.xlu0
      %v215 = vpop.trf.xlu0
      %v216 = vpop.trf.xlu0
      %v217 = vpop.trf.xlu0
      %v218 = vpop.trf.xlu0
      %v219 = vpop.trf.xlu0
      %v220 = vpop.trf.xlu0
      %v221 = vpop.trf.xlu0
      %v222 = vmul.f32 %v206, %v206
      %v223 = vsub.f32 %v222, 1.0
      %v224 = vmax.f32 %v223, 1e-15
      %v225 = vrsqrt.pop %v224
      %v226 = vmul.f32 %v224, %v225
      %v227 = vadd.f32 %v206, %v226
      %v228 = vlog2.pop %v227
      %v229 = vmul.f32 %v228, 0.6931472
      %v230 = vmul.f32 %v229, %v225
      %v231 = vadd.f32 %v206, %v207
      %v232 = vadd.f32 %v231, %v208
      %v233 = vadd.f32 %v232, %v209
      %vm234 = vcmask 1040384
      %v235 = vsel %vm234, %v210, 0.0
      %v236 = vadd.f32 %v233, %v235
      %v237 = vrot.slane %v236, 4
      %v238 = vadd.f32 %v236, %v237
      %v239 = vrot.slane %v238, 2
      %v240 = vadd.f32 %v238, %v239
      %v241 = vrot.slane %v240, 1
      %v242 = vadd.f32 %v240, %v241
      %v243 = vsub.f32 %v242, %v206
      %v244 = vmul.f32 %v207, %v207
      %v245 = vmul.f32 %v208, %v208
      %v246 = vmul.f32 %v209, %v209
      %v247 = vmul.f32 %v210, %v210
      %v248 = vadd.f32 %v222, %v244
      %v249 = vadd.f32 %v248, %v245
      %v250 = vadd.f32 %v249, %v246
      %v251 = vsel %vm234, %v247, 0.0
      %v252 = vadd.f32 %v250, %v251
      %v253 = vrot.slane %v252, 4
      %v254 = vadd.f32 %v252, %v253
      %v255 = vrot.slane %v254, 2
      %v256 = vadd.f32 %v254, %v255
      %v257 = vrot.slane %v256, 1
      %v258 = vadd.f32 %v256, %v257
      %v259 = vsub.f32 %v258, %v222
      %v260 = vmul.f32 %v230, %v243
      %v261 = vmul.f32 %v260, 0.03125
      %v262 = vmul.f32 %v230, %v230
      %v263 = vmul.f32 %v262, %v259
      %v264 = vmul.f32 %v263, 0.03125
      %v265 = vmul.f32 %v261, %v261
      %v266 = vsub.f32 %v264, %v265
      %v267 = vmax.f32 %v266, 0.0
      %v268 = vadd.f32 %v267, 1e-05
      %v269 = vrsqrt.pop %v268
      %v270 = vmul.f32 %v230, %v269
      %v271 = vsub.f32 0.0, %v261
      %v272 = vmul.f32 %v271, %v269
      %v273 = vlaneseq
      %v274 = vshrl.u32 %v273, 7
      %v275 = vsub.s32 0, %v274
      %v276 = vrot.slane %v270, %v275
      %v277 = vmul.f32 %v276, %v206
      %v278 = vmul.f32 %v276, %v207
      %v279 = vmul.f32 %v276, %v208
      %v280 = vmul.f32 %v276, %v209
      %v281 = vmul.f32 %v276, %v210
      %v282 = vlaneseq
      %v283 = vshrl.u32 %v282, 7
      %v284 = vsub.s32 0, %v283
      %v285 = vrot.slane %v272, %v284
      %v286 = vadd.f32 %v277, %v285
      %v287 = vadd.f32 %v278, %v285
      %v288 = vadd.f32 %v279, %v285
      %v289 = vadd.f32 %v280, %v285
      %v290 = vadd.f32 %v281, %v285
      %v291 = vld [vmem:[%s1] sm:$0xff]
      %v292 = vld [vmem:[%s1 + $0x8] sm:$0xff]
      %v293 = vld [vmem:[%s1 + $0x10] sm:$0xff]
      %v294 = vld [vmem:[%s1 + $0x18] sm:$0xff]
      %v295 = vld [vmem:[%s1 + $0x20] sm:$0x1]
      %297 = vset.pattern.permute.xlu0 0
      %298 = vperm.xlu0 %297, %v291
      %v299 = vpop.permute.xlu0 %298
      %302 = vset.pattern.permute.xlu0 0
      %303 = vperm.xlu0 %302, %v292
      %v304 = vpop.permute.xlu0 %303
      %307 = vset.pattern.permute.xlu0 0
      %308 = vperm.xlu0 %307, %v293
      %v309 = vpop.permute.xlu0 %308
      %312 = vset.pattern.permute.xlu0 0
      %313 = vperm.xlu0 %312, %v294
      %v314 = vpop.permute.xlu0 %313
      %317 = vset.pattern.permute.xlu0 0
      %318 = vperm.xlu0 %317, %v295
      %v319 = vpop.permute.xlu0 %318
      %v321 = vmul.f32 %v286, %v299
      %v322 = vmul.f32 %v287, %v304
      %v323 = vmul.f32 %v288, %v309
      %v324 = vmul.f32 %v289, %v314
      %v325 = vmul.f32 %v290, %v319
      %v326 = vld [vmem:[%s2] sm:$0xff]
      %v327 = vld [vmem:[%s2 + $0x8] sm:$0xff]
      %v328 = vld [vmem:[%s2 + $0x10] sm:$0xff]
      %v329 = vld [vmem:[%s2 + $0x18] sm:$0xff]
      %v330 = vld [vmem:[%s2 + $0x20] sm:$0x1]
      %332 = vset.pattern.permute.xlu0 0
      %333 = vperm.xlu0 %332, %v326
      %v334 = vpop.permute.xlu0 %333
      %337 = vset.pattern.permute.xlu0 0
      %338 = vperm.xlu0 %337, %v327
      %v339 = vpop.permute.xlu0 %338
      %342 = vset.pattern.permute.xlu0 0
      %343 = vperm.xlu0 %342, %v328
      %v344 = vpop.permute.xlu0 %343
      %347 = vset.pattern.permute.xlu0 0
      %348 = vperm.xlu0 %347, %v329
      %v349 = vpop.permute.xlu0 %348
      %352 = vset.pattern.permute.xlu0 0
      %353 = vperm.xlu0 %352, %v330
      %v354 = vpop.permute.xlu0 %353
      %v356 = vadd.f32 %v321, %v334
      %v357 = vadd.f32 %v322, %v339
      %v358 = vadd.f32 %v323, %v344
      %v359 = vadd.f32 %v324, %v349
      %v360 = vadd.f32 %v325, %v354
      %v361 = vmul.f32 %v356, %v356
      %v362 = vmul.f32 %v357, %v357
      %v363 = vmul.f32 %v358, %v358
      %v364 = vmul.f32 %v359, %v359
      %v365 = vmul.f32 %v360, %v360
      %v366 = vadd.f32 %v361, %v362
      %v367 = vadd.f32 %v366, %v363
      %v368 = vadd.f32 %v367, %v364
      %v369 = vsel %vm234, %v365, 0.0
      %v370 = vadd.f32 %v368, %v369
      %v371 = vrot.slane %v370, 4
      %v372 = vadd.f32 %v370, %v371
      %v373 = vrot.slane %v372, 2
      %v374 = vadd.f32 %v372, %v373
      %v375 = vrot.slane %v374, 1
      %v376 = vadd.f32 %v374, %v375
      %v377 = vmax.f32 %v376, 1e-08
      %v378 = vrsqrt.pop %v377
      %v379 = vmul.f32 %v377, %v378
      %v380 = vmul.f32 %v379, 1.442695
      %v381 = vpow.pop %v380
      %v382 = vsub.f32 0.0, %v379
      %v383 = vmul.f32 %v382, 1.442695
      %v384 = vpow.pop %v383
      %v385 = vadd.f32 %v381, %v384
      %v386 = vmul.f32 %v385, 0.5
      %v387 = vsub.f32 %v381, %v384
      %v388 = vmul.f32 %v387, 0.5
      %v389 = vmul.f32 %v388, %v378
      %v390 = vlaneseq
      %v391 = vshrl.u32 %v390, 7
      %v392 = vadd.s32 %v391, 8
      %v393 = vadd.s32 %v391, 16
      %v394 = vadd.s32 %v391, 24
      %v395 = vadd.s32 %v391, 32
      %vm396 = vcmp.eq.s32.totalorder %v391, 0
      %vm397 = vcmp.eq.s32.totalorder %v392, 0
      %vm398 = vcmp.eq.s32.totalorder %v393, 0
      %vm399 = vcmp.eq.s32.totalorder %v394, 0
      %vm400 = vcmp.eq.s32.totalorder %v395, 0
      %v401 = vmul.f32 %v389, %v356
      %v402 = vmul.f32 %v389, %v357
      %v403 = vmul.f32 %v389, %v358
      %v404 = vmul.f32 %v389, %v359
      %v405 = vmul.f32 %v389, %v360
      %v406 = vsel %vm396, 1, 0
      %v407 = vsel %vm397, 1, 0
      %v408 = vsel %vm398, 1, 0
      %v409 = vsel %vm399, 1, 0
      %v410 = vsel %vm400, 1, 0
      %vm411 = vcmp.eq.s32.totalorder %v406, 1
      %vm412 = vcmp.eq.s32.totalorder %v407, 1
      %vm413 = vcmp.eq.s32.totalorder %v408, 1
      %vm414 = vcmp.eq.s32.totalorder %v409, 1
      %vm415 = vcmp.eq.s32.totalorder %v410, 1
      %v416 = vsel %vm411, %v386, %v401
      %v417 = vsel %vm412, %v386, %v402
      %v418 = vsel %vm413, %v386, %v403
      %v419 = vsel %vm414, %v386, %v404
      %v420 = vsel %vm415, %v386, %v405
      %421 = vxpose.xlu0.b32.start [1/16] %v416, 128
      %422 = vxpose.xlu0.b32.cont [2/16] %v417, 128
      %423 = vxpose.xlu0.b32.cont [3/16] %v418, 128
      %424 = vxpose.xlu0.b32.cont [4/16] %v419, 128
      %425 = vxpose.xlu0.b32.cont [5/16] %v420, 128
      %426 = vxpose.xlu0.b32.cont [6/16] 0.0, 128
      %427 = vxpose.xlu0.b32.cont [7/16] 0.0, 128
      %428 = vxpose.xlu0.b32.cont [8/16] 0.0, 128
      %429 = vxpose.xlu0.b32.cont [9/16] 0.0, 128
      %430 = vxpose.xlu0.b32.cont [10/16] 0.0, 128
      %431 = vxpose.xlu0.b32.cont [11/16] 0.0, 128
      %432 = vxpose.xlu0.b32.cont [12/16] 0.0, 128
      %433 = vxpose.xlu0.b32.cont [13/16] 0.0, 128
      %434 = vxpose.xlu0.b32.cont [14/16] 0.0, 128
      %435 = vxpose.xlu0.b32.cont [15/16] 0.0, 128
      %436 = vxpose.xlu0.b32.end [16/16] 0.0, 128
      %v437 = vpop.trf.xlu0
      %v438 = vpop.trf.xlu0
      %v439 = vpop.trf.xlu0
      %v440 = vpop.trf.xlu0
      %v441 = vpop.trf.xlu0
      %v442 = vpop.trf.xlu0
      %v443 = vpop.trf.xlu0
      %v444 = vpop.trf.xlu0
      %v445 = vpop.trf.xlu0
      %v446 = vpop.trf.xlu0
      %v447 = vpop.trf.xlu0
      %v448 = vpop.trf.xlu0
      %v449 = vpop.trf.xlu0
      %v450 = vpop.trf.xlu0
      %v451 = vpop.trf.xlu0
      %v452 = vpop.trf.xlu0
      %vm453 = vcmask 269312
      %454 = vst.msk [vmem:[%s172] sm:$0xff] %vm453, %v437
      %455 = vst.msk [vmem:[%s172 + $0x8] sm:$0xff] %vm453, %v438
      %456 = vst.msk [vmem:[%s172 + $0x10] sm:$0xff] %vm453, %v439
      %457 = vst.msk [vmem:[%s172 + $0x18] sm:$0xff] %vm453, %v440
      %458 = vst.msk [vmem:[%s172 + $0x20] sm:$0xff] %vm453, %v441
      %459 = vst.msk [vmem:[%s172 + $0x28] sm:$0xff] %vm453, %v442
      %460 = vst.msk [vmem:[%s172 + $0x30] sm:$0xff] %vm453, %v443
      %461 = vst.msk [vmem:[%s172 + $0x38] sm:$0xff] %vm453, %v444
      %462 = vst.msk [vmem:[%s172 + $0x40] sm:$0xff] %vm453, %v445
      %463 = vst.msk [vmem:[%s172 + $0x48] sm:$0xff] %vm453, %v446
      %464 = vst.msk [vmem:[%s172 + $0x50] sm:$0xff] %vm453, %v447
      %465 = vst.msk [vmem:[%s172 + $0x58] sm:$0xff] %vm453, %v448
      %466 = vst.msk [vmem:[%s172 + $0x60] sm:$0xff] %vm453, %v449
      %467 = vst.msk [vmem:[%s172 + $0x68] sm:$0xff] %vm453, %v450
      %468 = vst.msk [vmem:[%s172 + $0x70] sm:$0xff] %vm453, %v451
      %469 = vst.msk [vmem:[%s172 + $0x78] sm:$0xff] %vm453, %v452
      %s470 = smul.u32 16, %s14
      %p471 = scmp.lt.s32.totalorder %s470, 31
      %s472 = scalar_select %p471, %s470, 31
      %s473 = smul.addr %s472, 8
      %s474 = scalar_lea.vmem %s3, %s473
      // Predicated region
      $region33: #{tpu_custom_call.1} parent=31 // pred_check
        %p475 = pneg %p100
      $region34: #{tpu_custom_call.1} parent=31 // pred_check_branch
        %477 = sbr.rel (%p475) target = $region36
      $region35: #{tpu_custom_call.1} parent=31 // pred_region
        %s478 = smul.u32 16, %s14
      $region36: #{tpu_custom_call.1} parent=31 // pred_fallthru
        _
    $region32: #{tpu_custom_call.1} parent=5 // pred_fallthru
      _
    %p479 = scmp.le.s32.totalorder 2, %s9
    // Predicated region
    $region37: #{tpu_custom_call.1} parent=5 // pred_check
      %p480 = pneg %p479
    $region38: #{tpu_custom_call.1} parent=5 // pred_check_branch
      %482 = sbr.rel (%p480) target = $region40
    $region39: #{tpu_custom_call.1} parent=5 // pred_region
      %s483 = ssub.s32 %s9, 2
      // Predicated region
      $region41: #{tpu_custom_call.1} parent=39 // pred_check
        %p484 = pneg %p106
      $region42: #{tpu_custom_call.1} parent=39 // pred_check_branch
        %486 = sbr.rel (%p484) target = $region44
      $region43: #{tpu_custom_call.1} parent=39 // pred_region
        %s487 = smul.u32 16, %s15
        %p488 = scmp.lt.s32.totalorder %s487, 31
        %s489 = scalar_select %p488, %s487, 31
        %s490 = smul.addr %s489, 8
        %s491 = scalar_lea.vmem %s3, %s490
      $region44: #{tpu_custom_call.1} parent=39 // pred_fallthru
        _
    $region40: #{tpu_custom_call.1} parent=5 // pred_fallthru
      _
  $region6: #{tpu_custom_call.1} parent=0 // loop_footer
    %s13 = sadd.s32 1, %s9
  $region7: #{tpu_custom_call.1} parent=0 // loop_footer_branch
    %8 = sbr.rel target = $region3
  $region8: #{tpu_custom_call.1} parent=0 // loop_exit
    _

</llo_original>
